<compile_context>
chip_gen: v6e
topology: v6e:2x2x1
jax: 0.10.0
libtpu: 0.0.40
codegen_flags: <defaults>
</compile_context>

<pallas_src>
import functools

import jax
import jax.numpy as jnp
from jax import lax
from jax.experimental import pallas as pl
from jax.experimental.pallas import tpu as pltpu

CH = 3            # channel_in
SPLIT1 = 1        # channel_out -> split_len1
SPLIT2 = CH - SPLIT1
CLAMP = 1.0
LANE = 128
STRIP_ROWS = 32   # sublane rows per in-kernel strip (4 vregs/plane in f32)


def _greynet_kernel(cw_ref, fw_ref, fb_ref, gw_ref, gb_ref, hw_ref, hb_ref,
                    x_ref, o_ref, *, num_blocks, tile_rows, strip_rows):
    """One (1, 3, tile_rows, 128) pixel block through ConvGrey + InvBlocks."""
    # Read the tiny scalar weight tables out of SMEM once per grid step.
    cw = [cw_ref[k] for k in range(9)]
    fw = [fw_ref[k] for k in range(2 * num_blocks)]
    fb = [fb_ref[k] for k in range(num_blocks)]
    gw = [gw_ref[k] for k in range(2 * num_blocks)]
    gb = [gb_ref[k] for k in range(2 * num_blocks)]
    hw = [hw_ref[k] for k in range(2 * num_blocks)]   # pre-scaled by 0.5
    hb = [hb_ref[k] for k in range(2 * num_blocks)]   # pre-scaled by 0.5

    def do_strip(r0, nrows):
        # Strip-sized planes live in vregs; only loads/stores touch VMEM.
        x0 = x_ref[0, 0, pl.ds(r0, nrows), :].astype(jnp.float32)
        x1 = x_ref[0, 1, pl.ds(r0, nrows), :].astype(jnp.float32)
        x2 = x_ref[0, 2, pl.ds(r0, nrows), :].astype(jnp.float32)

        # ConvGrey: 1x1 colour transform as scalar-broadcast FMAs (VPU).
        c0 = cw[0] * x0 + cw[1] * x1 + cw[2] * x2
        d0 = cw[3] * x0 + cw[4] * x1 + cw[5] * x2
        d1 = cw[6] * x0 + cw[7] * x1 + cw[8] * x2

        # InvBlock chain (forward, rev=False); channels kept as planes.
        for j in range(num_blocks):
            a0, b0, b1 = c0, d0, d1
            # F: split_len2 -> split_len1  (2 -> 1 channels)
            c0 = a0 + fw[2 * j] * b0 + fw[2 * j + 1] * b1 + fb[j]
            # H: 1 -> 2; s = clamp*(2*sigmoid(h)-1) == clamp*tanh(0.5*h);
            # the 0.5 is folded into hw/hb host-side, clamp == 1.0.
            s0 = jnp.tanh(hw[2 * j] * c0 + hb[2 * j])
            s1 = jnp.tanh(hw[2 * j + 1] * c0 + hb[2 * j + 1])
            if CLAMP != 1.0:
                s0 = CLAMP * s0
                s1 = CLAMP * s1
            # G: 1 -> 2
            d0 = b0 * jnp.exp(s0) + gw[2 * j] * c0 + gb[2 * j]
            d1 = b1 * jnp.exp(s1) + gw[2 * j + 1] * c0 + gb[2 * j + 1]

        o_ref[0, 0, pl.ds(r0, nrows), :] = c0.astype(o_ref.dtype)
        o_ref[0, 1, pl.ds(r0, nrows), :] = d0.astype(o_ref.dtype)
        o_ref[0, 2, pl.ds(r0, nrows), :] = d1.astype(o_ref.dtype)

    n_full = tile_rows // strip_rows
    rem = tile_rows - n_full * strip_rows

    if n_full == 1:
        do_strip(0, strip_rows)
    elif n_full > 1:
        def body(i, carry):
            do_strip(pl.multiple_of(i * strip_rows, strip_rows), strip_rows)
            return carry
        lax.fori_loop(0, n_full, body, 0,
                      unroll=True if n_full <= 8 else 4)
    if rem > 0:
        do_strip(n_full * strip_rows, rem)


def greynet_forward(x_nchw, params, *, tile_rows=1024, strip_rows=STRIP_ROWS):
    """GreyNet forward (rev=False, c=False).

    x_nchw: (N, 3, H, W); f32 or bf16 I/O (compute is always f32 in-kernel).
    params: dict with conv_w (3,3) and per-block stacked F/G/H weights/biases.
    tile_rows: 128-lane pixel rows per grid step (multiple of 8). 1024 is a
               good cross-generation default; 2048 amortizes per-step overhead
               better on v7x.
    """
    N, C, H, W = x_nchw.shape
    assert C == CH
    HW = H * W
    num_blocks = params["f_w"].shape[0]

    # Pure reshape of NCHW (no transpose / data movement): (N, 3, HW).
    x = x_nchw.reshape(N, C, HW)

    rows = pl.cdiv(HW, LANE)
    padded_hw = rows * LANE
    if padded_hw != HW:
        # Only a ragged (<128 px) lane tail forces a pad; lane-aligned images
        # (the common case) take zero extra HBM passes.
        x = jnp.pad(x, ((0, 0), (0, 0), (0, padded_hw - HW)))
    x = x.reshape(N, C, rows, LANE)

    # Row tiling.  A ragged last row-tile is handled by Pallas boundary
    # masking, so `rows` is never rounded up to a multiple of tile_rows.
    if rows <= tile_rows:
        if N == 1 and rows >= 16 and rows % 16 == 0:
            tr = rows // 2   # >=2 grid steps so the 2nd TensorCore (v7x) has work
        else:
            tr = rows        # single row tile == full dim (any size is legal)
    else:
        assert tile_rows % 8 == 0, "tile_rows must be a multiple of 8"
        tr = tile_rows
    num_row_tiles = pl.cdiv(rows, tr)

    # Tiny channel-mixing weights -> flat f32 scalar tables in SMEM.
    cw = params["conv_w"].reshape(-1).astype(jnp.float32)        # (9,)
    fw = params["f_w"].reshape(-1).astype(jnp.float32)           # (nb*2,)
    fb = params["f_b"].reshape(-1).astype(jnp.float32)           # (nb,)
    gw = params["g_w"].reshape(-1).astype(jnp.float32)           # (nb*2,)
    gb = params["g_b"].reshape(-1).astype(jnp.float32)           # (nb*2,)
    # Fold the sigmoid->tanh 0.5 into the H tables (host-side scalar prep).
    hw_ = (0.5 * params["h_w"]).reshape(-1).astype(jnp.float32)  # (nb*2,)
    hb = (0.5 * params["h_b"]).reshape(-1).astype(jnp.float32)   # (nb*2,)

    smem_spec = pl.BlockSpec(memory_space=pltpu.MemorySpace.SMEM)
    pix_spec = pl.BlockSpec((1, C, tr, LANE), lambda n, r: (n, 0, r, 0))
    # NOTE: if a trace ever shows exposed input DMA on v7x, a 3-deep input
    # pipeline (pipeline_mode=pl.Buffered(3) on pix_spec) is a cheap sweep.

    # VMEM budget: double-buffered in + out blocks + slack, capped to the
    # chip's physical VMEM (64 MiB/TC on v7x, 128 MiB on v5e/v6e).
    blk_in = C * tr * LANE * x.dtype.itemsize
    blk_out = C * tr * LANE * jnp.dtype(x_nchw.dtype).itemsize
    vmem_cap = 64 << 20
    try:
        vmem_cap = int(pltpu.get_tpu_info().vmem_capacity_bytes)
    except Exception:
        pass
    vmem_limit = max(32 << 20, 2 * blk_in + 2 * blk_out + (4 << 20))
    vmem_limit = max(16 << 20, min(vmem_limit, vmem_cap - (8 << 20)))

    kernel = functools.partial(_greynet_kernel, num_blocks=num_blocks,
                               tile_rows=tr, strip_rows=strip_rows)

    out = pl.pallas_call(
        kernel,
        out_shape=jax.ShapeDtypeStruct((N, C, rows, LANE), x_nchw.dtype),
        grid_spec=pltpu.PrefetchScalarGridSpec(
            num_scalar_prefetch=0,
            grid=(N, num_row_tiles),
            in_specs=[smem_spec] * 7 + [pix_spec],
            out_specs=pix_spec,
        ),
        compiler_params=pltpu.CompilerParams(
            dimension_semantics=("parallel", "parallel"),
            vmem_limit_bytes=int(vmem_limit),
        ),
    )(cw, fw, fb, gw, gb, hw_, hb, x)

    out = out.reshape(N, C, padded_hw)
    if padded_hw != HW:
        out = out[:, :, :HW]
    return out.reshape(N, C, H, W)


def make_params(rgb_type="RGB", num_blocks=2, key=jax.random.PRNGKey(0)):
    if rgb_type == "RGB":
        conv_w = jnp.array([[0.299, 0.587, 0.114],
                            [-0.147, -0.289, 0.436],
                            [0.615, -0.515, -0.1]], dtype=jnp.float32)
    elif rgb_type == "BGR":
        conv_w = jnp.array([[0.114, 0.587, 0.299],
                            [0.436, -0.289, -0.147],
                            [-0.1, -0.515, 0.615]], dtype=jnp.float32)
    else:
        raise ValueError(rgb_type)

    ks = jax.random.split(key, 6)
    return {
        "conv_w": conv_w,
        "f_w": 0.1 * jax.random.normal(ks[0], (num_blocks, SPLIT1, SPLIT2), jnp.float32),
        "f_b": 0.1 * jax.random.normal(ks[1], (num_blocks, SPLIT1, 1), jnp.float32),
        "g_w": 0.1 * jax.random.normal(ks[2], (num_blocks, SPLIT2, SPLIT1), jnp.float32),
        "g_b": 0.1 * jax.random.normal(ks[3], (num_blocks, SPLIT2, 1), jnp.float32),
        "h_w": 0.1 * jax.random.normal(ks[4], (num_blocks, SPLIT2, SPLIT1), jnp.float32),
        "h_b": 0.1 * jax.random.normal(ks[5], (num_blocks, SPLIT2, 1), jnp.float32),
    }


def greynet_reference(x_nchw, params):
    """Pure-JAX reference of the same forward pass (original sigmoid form)."""
    N, C, H, W = x_nchw.shape
    x = x_nchw.reshape(N, C, -1).astype(jnp.float32)               # (N, 3, HW)
    y = jnp.einsum("ck,nkp->ncp", params["conv_w"], x)
    nb = params["f_w"].shape[0]
    for j in range(nb):
        a, b = y[:, :SPLIT1], y[:, SPLIT1:]
        c = a + jnp.einsum("ok,nkp->nop", params["f_w"][j], b) + params["f_b"][j]
        s = CLAMP * (jax.nn.sigmoid(
            jnp.einsum("ok,nkp->nop", params["h_w"][j], c) + params["h_b"][j]) * 2 - 1)
        d = b * jnp.exp(s) + jnp.einsum("ok,nkp->nop", params["g_w"][j], c) + params["g_b"][j]
        y = jnp.concatenate([c, d], axis=1)
    return y.reshape(N, C, H, W)


if __name__ == "__main__":
    key = jax.random.PRNGKey(0)
    kx, kp = jax.random.split(key)
    params = make_params(rgb_type="RGB", num_blocks=2, key=kp)

    # 1) Small NCHW input: batch=2, channels=3 (RGB), spatial=16x16.
    x = jax.random.uniform(kx, (2, 3, 16, 16), dtype=jnp.float32)
    out = jax.block_until_ready(greynet_forward(x, params))
    ref = greynet_reference(x, params)
    assert out.shape == x.shape
    assert jnp.allclose(out, ref, atol=1e-5, rtol=1e-5)

    # 2) Single larger image: exercises the megacore row split and the
    #    in-kernel strip path (single full strip + remainder strip).
    x2 = jax.random.uniform(jax.random.PRNGKey(1), (1, 3, 80, 128), dtype=jnp.float32)
    ref2 = greynet_reference(x2, params)
    out2 = jax.block_until_ready(greynet_forward(x2, params))
    assert jnp.allclose(out2, ref2, atol=1e-5, rtol=1e-5)

    # 2b) Smaller strips -> exercises the fori_loop strip path.
    out2b = jax.block_until_ready(greynet_forward(x2, params, strip_rows=16))
    assert jnp.allclose(out2b, ref2, atol=1e-5, rtol=1e-5)

    # 3) Tile that does not divide the row count -> ragged last row-tile
    #    (handled by Pallas boundary masking, no host-side padding).
    out3 = jax.block_until_ready(greynet_forward(x2, params, tile_rows=24))
    assert jnp.allclose(out3, ref2, atol=1e-5, rtol=1e-5)

    # 4) bf16 I/O path (f32 math stays in-kernel).
    x4 = jax.random.uniform(jax.random.PRNGKey(2), (1, 3, 64, 128),
                            dtype=jnp.float32).astype(jnp.bfloat16)
    out4 = jax.block_until_ready(greynet_forward(x4, params))
    ref4 = greynet_reference(x4.astype(jnp.float32), params)
    assert out4.dtype == jnp.bfloat16
    assert jnp.allclose(out4.astype(jnp.float32), ref4, atol=3e-2, rtol=3e-2)

    print("KERNEL_OK")
</pallas_src>

<mosaic_0001>
module attributes {stable_mosaic.version = 11 : i64} {
  func.func @_greynet_kernel(%arg0: i32, %arg1: i32, %arg2: memref<9xf32, #tpu.memory_space<smem>>, %arg3: memref<4xf32, #tpu.memory_space<smem>>, %arg4: memref<2xf32, #tpu.memory_space<smem>>, %arg5: memref<4xf32, #tpu.memory_space<smem>>, %arg6: memref<4xf32, #tpu.memory_space<smem>>, %arg7: memref<4xf32, #tpu.memory_space<smem>>, %arg8: memref<4xf32, #tpu.memory_space<smem>>, %arg9: memref<1x3x2x128xf32, #tpu.memory_space<vmem>>, %arg10: memref<1x3x2x128xf32, #tpu.memory_space<vmem>>) attributes {dimension_semantics = [#tpu.dimension_semantics<parallel>, #tpu.dimension_semantics<parallel>], iteration_bounds = array<i64: 2, 1>, scalar_prefetch = 0 : i64, scratch_operands = 0 : i64, tpu.core_type = #tpu.core_type<tc>, window_params = [{transform_indices = @transform_0, window_bounds = array<i64: 9>}, {transform_indices = @transform_1, window_bounds = array<i64: 4>}, {transform_indices = @transform_2, window_bounds = array<i64: 2>}, {transform_indices = @transform_3, window_bounds = array<i64: 4>}, {transform_indices = @transform_4, window_bounds = array<i64: 4>}, {transform_indices = @transform_5, window_bounds = array<i64: 4>}, {transform_indices = @transform_6, window_bounds = array<i64: 4>}, {transform_indices = @transform_7, window_bounds = array<i64: 1, 3, 2, 128>}, {transform_indices = @transform_8, window_bounds = array<i64: 1, 3, 2, 128>}]} {
    %c0 = arith.constant 0 : index
    %0 = memref.load %arg2[%c0] : memref<9xf32, #tpu.memory_space<smem>>
    %c1 = arith.constant 1 : index
    %1 = memref.load %arg2[%c1] : memref<9xf32, #tpu.memory_space<smem>>
    %c2 = arith.constant 2 : index
    %2 = memref.load %arg2[%c2] : memref<9xf32, #tpu.memory_space<smem>>
    %c3 = arith.constant 3 : index
    %3 = memref.load %arg2[%c3] : memref<9xf32, #tpu.memory_space<smem>>
    %c4 = arith.constant 4 : index
    %4 = memref.load %arg2[%c4] : memref<9xf32, #tpu.memory_space<smem>>
    %c5 = arith.constant 5 : index
    %5 = memref.load %arg2[%c5] : memref<9xf32, #tpu.memory_space<smem>>
    %c6 = arith.constant 6 : index
    %6 = memref.load %arg2[%c6] : memref<9xf32, #tpu.memory_space<smem>>
    %c7 = arith.constant 7 : index
    %7 = memref.load %arg2[%c7] : memref<9xf32, #tpu.memory_space<smem>>
    %c8 = arith.constant 8 : index
    %8 = memref.load %arg2[%c8] : memref<9xf32, #tpu.memory_space<smem>>
    %c0_0 = arith.constant 0 : index
    %9 = memref.load %arg3[%c0_0] : memref<4xf32, #tpu.memory_space<smem>>
    %c1_1 = arith.constant 1 : index
    %10 = memref.load %arg3[%c1_1] : memref<4xf32, #tpu.memory_space<smem>>
    %c2_2 = arith.constant 2 : index
    %11 = memref.load %arg3[%c2_2] : memref<4xf32, #tpu.memory_space<smem>>
    %c3_3 = arith.constant 3 : index
    %12 = memref.load %arg3[%c3_3] : memref<4xf32, #tpu.memory_space<smem>>
    %c0_4 = arith.constant 0 : index
    %13 = memref.load %arg4[%c0_4] : memref<2xf32, #tpu.memory_space<smem>>
    %c1_5 = arith.constant 1 : index
    %14 = memref.load %arg4[%c1_5] : memref<2xf32, #tpu.memory_space<smem>>
    %c0_6 = arith.constant 0 : index
    %15 = memref.load %arg5[%c0_6] : memref<4xf32, #tpu.memory_space<smem>>
    %c1_7 = arith.constant 1 : index
    %16 = memref.load %arg5[%c1_7] : memref<4xf32, #tpu.memory_space<smem>>
    %c2_8 = arith.constant 2 : index
    %17 = memref.load %arg5[%c2_8] : memref<4xf32, #tpu.memory_space<smem>>
    %c3_9 = arith.constant 3 : index
    %18 = memref.load %arg5[%c3_9] : memref<4xf32, #tpu.memory_space<smem>>
    %c0_10 = arith.constant 0 : index
    %19 = memref.load %arg6[%c0_10] : memref<4xf32, #tpu.memory_space<smem>>
    %c1_11 = arith.constant 1 : index
    %20 = memref.load %arg6[%c1_11] : memref<4xf32, #tpu.memory_space<smem>>
    %c2_12 = arith.constant 2 : index
    %21 = memref.load %arg6[%c2_12] : memref<4xf32, #tpu.memory_space<smem>>
    %c3_13 = arith.constant 3 : index
    %22 = memref.load %arg6[%c3_13] : memref<4xf32, #tpu.memory_space<smem>>
    %c0_14 = arith.constant 0 : index
    %23 = memref.load %arg7[%c0_14] : memref<4xf32, #tpu.memory_space<smem>>
    %c1_15 = arith.constant 1 : index
    %24 = memref.load %arg7[%c1_15] : memref<4xf32, #tpu.memory_space<smem>>
    %c2_16 = arith.constant 2 : index
    %25 = memref.load %arg7[%c2_16] : memref<4xf32, #tpu.memory_space<smem>>
    %c3_17 = arith.constant 3 : index
    %26 = memref.load %arg7[%c3_17] : memref<4xf32, #tpu.memory_space<smem>>
    %c0_18 = arith.constant 0 : index
    %27 = memref.load %arg8[%c0_18] : memref<4xf32, #tpu.memory_space<smem>>
    %c1_19 = arith.constant 1 : index
    %28 = memref.load %arg8[%c1_19] : memref<4xf32, #tpu.memory_space<smem>>
    %c2_20 = arith.constant 2 : index
    %29 = memref.load %arg8[%c2_20] : memref<4xf32, #tpu.memory_space<smem>>
    %c3_21 = arith.constant 3 : index
    %30 = memref.load %arg8[%c3_21] : memref<4xf32, #tpu.memory_space<smem>>
    %c0_22 = arith.constant 0 : index
    %c0_23 = arith.constant 0 : index
    %c0_24 = arith.constant 0 : index
    %c0_25 = arith.constant 0 : index
    %31 = vector.load %arg9[%c0_22, %c0_23, %c0_24, %c0_25] : memref<1x3x2x128xf32, #tpu.memory_space<vmem>>, vector<1x1x2x128xf32>
    %32 = vector.shape_cast %31 : vector<1x1x2x128xf32> to vector<2x128xf32>
    %c0_26 = arith.constant 0 : index
    %c1_27 = arith.constant 1 : index
    %c0_28 = arith.constant 0 : index
    %c0_29 = arith.constant 0 : index
    %33 = vector.load %arg9[%c0_26, %c1_27, %c0_28, %c0_29] : memref<1x3x2x128xf32, #tpu.memory_space<vmem>>, vector<1x1x2x128xf32>
    %34 = vector.shape_cast %33 : vector<1x1x2x128xf32> to vector<2x128xf32>
    %c0_30 = arith.constant 0 : index
    %c2_31 = arith.constant 2 : index
    %c0_32 = arith.constant 0 : index
    %c0_33 = arith.constant 0 : index
    %35 = vector.load %arg9[%c0_30, %c2_31, %c0_32, %c0_33] : memref<1x3x2x128xf32, #tpu.memory_space<vmem>>, vector<1x1x2x128xf32>
    %36 = vector.shape_cast %35 : vector<1x1x2x128xf32> to vector<2x128xf32>
    %37 = vector.broadcast %0 : f32 to vector<2x128xf32>
    %38 = arith.mulf %37, %32 : vector<2x128xf32>
    %39 = vector.broadcast %1 : f32 to vector<2x128xf32>
    %40 = arith.mulf %39, %34 : vector<2x128xf32>
    %41 = arith.addf %38, %40 : vector<2x128xf32>
    %42 = vector.broadcast %2 : f32 to vector<2x128xf32>
    %43 = arith.mulf %42, %36 : vector<2x128xf32>
    %44 = arith.addf %41, %43 : vector<2x128xf32>
    %45 = vector.broadcast %3 : f32 to vector<2x128xf32>
    %46 = arith.mulf %45, %32 : vector<2x128xf32>
    %47 = vector.broadcast %4 : f32 to vector<2x128xf32>
    %48 = arith.mulf %47, %34 : vector<2x128xf32>
    %49 = arith.addf %46, %48 : vector<2x128xf32>
    %50 = vector.broadcast %5 : f32 to vector<2x128xf32>
    %51 = arith.mulf %50, %36 : vector<2x128xf32>
    %52 = arith.addf %49, %51 : vector<2x128xf32>
    %53 = vector.broadcast %6 : f32 to vector<2x128xf32>
    %54 = arith.mulf %53, %32 : vector<2x128xf32>
    %55 = vector.broadcast %7 : f32 to vector<2x128xf32>
    %56 = arith.mulf %55, %34 : vector<2x128xf32>
    %57 = arith.addf %54, %56 : vector<2x128xf32>
    %58 = vector.broadcast %8 : f32 to vector<2x128xf32>
    %59 = arith.mulf %58, %36 : vector<2x128xf32>
    %60 = arith.addf %57, %59 : vector<2x128xf32>
    %61 = vector.broadcast %9 : f32 to vector<2x128xf32>
    %62 = arith.mulf %61, %52 : vector<2x128xf32>
    %63 = arith.addf %44, %62 : vector<2x128xf32>
    %64 = vector.broadcast %10 : f32 to vector<2x128xf32>
    %65 = arith.mulf %64, %60 : vector<2x128xf32>
    %66 = arith.addf %63, %65 : vector<2x128xf32>
    %67 = vector.broadcast %13 : f32 to vector<2x128xf32>
    %68 = arith.addf %66, %67 : vector<2x128xf32>
    %69 = vector.broadcast %23 : f32 to vector<2x128xf32>
    %70 = arith.mulf %69, %68 : vector<2x128xf32>
    %71 = vector.broadcast %27 : f32 to vector<2x128xf32>
    %72 = arith.addf %70, %71 : vector<2x128xf32>
    %73 = math.tanh %72 : vector<2x128xf32>
    %74 = vector.broadcast %24 : f32 to vector<2x128xf32>
    %75 = arith.mulf %74, %68 : vector<2x128xf32>
    %76 = vector.broadcast %28 : f32 to vector<2x128xf32>
    %77 = arith.addf %75, %76 : vector<2x128xf32>
    %78 = math.tanh %77 : vector<2x128xf32>
    %79 = math.exp %73 : vector<2x128xf32>
    %80 = arith.mulf %52, %79 : vector<2x128xf32>
    %81 = vector.broadcast %15 : f32 to vector<2x128xf32>
    %82 = arith.mulf %81, %68 : vector<2x128xf32>
    %83 = arith.addf %80, %82 : vector<2x128xf32>
    %84 = vector.broadcast %19 : f32 to vector<2x128xf32>
    %85 = arith.addf %83, %84 : vector<2x128xf32>
    %86 = math.exp %78 : vector<2x128xf32>
    %87 = arith.mulf %60, %86 : vector<2x128xf32>
    %88 = vector.broadcast %16 : f32 to vector<2x128xf32>
    %89 = arith.mulf %88, %68 : vector<2x128xf32>
    %90 = arith.addf %87, %89 : vector<2x128xf32>
    %91 = vector.broadcast %20 : f32 to vector<2x128xf32>
    %92 = arith.addf %90, %91 : vector<2x128xf32>
    %93 = vector.broadcast %11 : f32 to vector<2x128xf32>
    %94 = arith.mulf %93, %85 : vector<2x128xf32>
    %95 = arith.addf %68, %94 : vector<2x128xf32>
    %96 = vector.broadcast %12 : f32 to vector<2x128xf32>
    %97 = arith.mulf %96, %92 : vector<2x128xf32>
    %98 = arith.addf %95, %97 : vector<2x128xf32>
    %99 = vector.broadcast %14 : f32 to vector<2x128xf32>
    %100 = arith.addf %98, %99 : vector<2x128xf32>
    %101 = vector.broadcast %25 : f32 to vector<2x128xf32>
    %102 = arith.mulf %101, %100 : vector<2x128xf32>
    %103 = vector.broadcast %29 : f32 to vector<2x128xf32>
    %104 = arith.addf %102, %103 : vector<2x128xf32>
    %105 = math.tanh %104 : vector<2x128xf32>
    %106 = vector.broadcast %26 : f32 to vector<2x128xf32>
    %107 = arith.mulf %106, %100 : vector<2x128xf32>
    %108 = vector.broadcast %30 : f32 to vector<2x128xf32>
    %109 = arith.addf %107, %108 : vector<2x128xf32>
    %110 = math.tanh %109 : vector<2x128xf32>
    %111 = math.exp %105 : vector<2x128xf32>
    %112 = arith.mulf %85, %111 : vector<2x128xf32>
    %113 = vector.broadcast %17 : f32 to vector<2x128xf32>
    %114 = arith.mulf %113, %100 : vector<2x128xf32>
    %115 = arith.addf %112, %114 : vector<2x128xf32>
    %116 = vector.broadcast %21 : f32 to vector<2x128xf32>
    %117 = arith.addf %115, %116 : vector<2x128xf32>
    %118 = math.exp %110 : vector<2x128xf32>
    %119 = arith.mulf %92, %118 : vector<2x128xf32>
    %120 = vector.broadcast %18 : f32 to vector<2x128xf32>
    %121 = arith.mulf %120, %100 : vector<2x128xf32>
    %122 = arith.addf %119, %121 : vector<2x128xf32>
    %123 = vector.broadcast %22 : f32 to vector<2x128xf32>
    %124 = arith.addf %122, %123 : vector<2x128xf32>
    %c0_34 = arith.constant 0 : index
    %c0_35 = arith.constant 0 : index
    %c0_36 = arith.constant 0 : index
    %c0_37 = arith.constant 0 : index
    %125 = vector.load %arg10[%c0_34, %c0_35, %c0_36, %c0_37] : memref<1x3x2x128xf32, #tpu.memory_space<vmem>>, vector<1x1x2x128xf32>
    %126 = vector.shape_cast %125 : vector<1x1x2x128xf32> to vector<2x128xf32>
    %127 = vector.shape_cast %100 : vector<2x128xf32> to vector<1x1x2x128xf32>
    tpu.vector_store %arg10[%c0_34, %c0_35, %c0_36, %c0_37], %127 {strides = array<i32>} : memref<1x3x2x128xf32, #tpu.memory_space<vmem>>, vector<1x1x2x128xf32>,
    %c0_38 = arith.constant 0 : index
    %c1_39 = arith.constant 1 : index
    %c0_40 = arith.constant 0 : index
    %c0_41 = arith.constant 0 : index
    %128 = vector.load %arg10[%c0_38, %c1_39, %c0_40, %c0_41] : memref<1x3x2x128xf32, #tpu.memory_space<vmem>>, vector<1x1x2x128xf32>
    %129 = vector.shape_cast %128 : vector<1x1x2x128xf32> to vector<2x128xf32>
    %130 = vector.shape_cast %117 : vector<2x128xf32> to vector<1x1x2x128xf32>
    tpu.vector_store %arg10[%c0_38, %c1_39, %c0_40, %c0_41], %130 {strides = array<i32>} : memref<1x3x2x128xf32, #tpu.memory_space<vmem>>, vector<1x1x2x128xf32>,
    %c0_42 = arith.constant 0 : index
    %c2_43 = arith.constant 2 : index
    %c0_44 = arith.constant 0 : index
    %c0_45 = arith.constant 0 : index
    %131 = vector.load %arg10[%c0_42, %c2_43, %c0_44, %c0_45] : memref<1x3x2x128xf32, #tpu.memory_space<vmem>>, vector<1x1x2x128xf32>
    %132 = vector.shape_cast %131 : vector<1x1x2x128xf32> to vector<2x128xf32>
    %133 = vector.shape_cast %124 : vector<2x128xf32> to vector<1x1x2x128xf32>
    tpu.vector_store %arg10[%c0_42, %c2_43, %c0_44, %c0_45], %133 {strides = array<i32>} : memref<1x3x2x128xf32, #tpu.memory_space<vmem>>, vector<1x1x2x128xf32>,
    return
  }
  func.func @transform_0(%arg0: i32, %arg1: i32) -> i32 {
    %c0_i32 = arith.constant 0 : i32
    %c0_i32_0 = arith.constant 0 : i32
    return %c0_i32 : i32
  }
  func.func @transform_1(%arg0: i32, %arg1: i32) -> i32 {
    %c0_i32 = arith.constant 0 : i32
    %c0_i32_0 = arith.constant 0 : i32
    return %c0_i32 : i32
  }
  func.func @transform_2(%arg0: i32, %arg1: i32) -> i32 {
    %c0_i32 = arith.constant 0 : i32
    %c0_i32_0 = arith.constant 0 : i32
    return %c0_i32 : i32
  }
  func.func @transform_3(%arg0: i32, %arg1: i32) -> i32 {
    %c0_i32 = arith.constant 0 : i32
    %c0_i32_0 = arith.constant 0 : i32
    return %c0_i32 : i32
  }
  func.func @transform_4(%arg0: i32, %arg1: i32) -> i32 {
    %c0_i32 = arith.constant 0 : i32
    %c0_i32_0 = arith.constant 0 : i32
    return %c0_i32 : i32
  }
  func.func @transform_5(%arg0: i32, %arg1: i32) -> i32 {
    %c0_i32 = arith.constant 0 : i32
    %c0_i32_0 = arith.constant 0 : i32
    return %c0_i32 : i32
  }
  func.func @transform_6(%arg0: i32, %arg1: i32) -> i32 {
    %c0_i32 = arith.constant 0 : i32
    %c0_i32_0 = arith.constant 0 : i32
    return %c0_i32 : i32
  }
  func.func @transform_7(%arg0: i32, %arg1: i32) -> (i32, i32, i32, i32) {
    %c0_i32 = arith.constant 0 : i32
    %c0_i32_0 = arith.constant 0 : i32
    %c0_i32_1 = arith.constant 0 : i32
    return %arg0, %c0_i32, %arg1, %c0_i32_0 : i32, i32, i32, i32
  }
  func.func @transform_8(%arg0: i32, %arg1: i32) -> (i32, i32, i32, i32) {
    %c0_i32 = arith.constant 0 : i32
    %c0_i32_0 = arith.constant 0 : i32
    %c0_i32_1 = arith.constant 0 : i32
    return %arg0, %c0_i32, %arg1, %c0_i32_0 : i32, i32, i32, i32
  }
}

</mosaic_0001>

<llo_original>
// kernel: tpu_custom_call.1
$region0: #{tpu_custom_call.1}
  #allocation0 [shape = 'u32[]', space=smem, size = 0x4, offset = 0x4, fixed_abs, tag = 'smem constant byte address 0x4 - core index']
  #allocation1 [shape = 'u32[144,128]{1,0:T(1,128)}', space=vmem, size = 0x12000, scoped, tag = 'internal scratch']
  %s0 = inlined_call_operand.hbm [shape: f32[9], index: 0, kind: input, shape index: {}]
  %s1 = inlined_call_operand.hbm [shape: f32[4], index: 1, kind: input, shape index: {}]
  %s2 = inlined_call_operand.hbm [shape: f32[2], index: 2, kind: input, shape index: {}]
  %s3 = inlined_call_operand.hbm [shape: f32[4], index: 3, kind: input, shape index: {}]
  %s4 = inlined_call_operand.hbm [shape: f32[4], index: 4, kind: input, shape index: {}]
  %s5 = inlined_call_operand.hbm [shape: f32[4], index: 5, kind: input, shape index: {}]
  %s6 = inlined_call_operand.hbm [shape: f32[4], index: 6, kind: input, shape index: {}]
  %s7 = inlined_call_operand.vmem [shape: f32[2,3,2,128], index: 7, kind: input, shape index: {}]
  %s8 = inlined_call_operand.hbm [shape: f32[2,3,2,128], index: 8, kind: output, shape index: {}]
  %s9 = sld [smem:[#allocation0]]
  $region93: #{tpu_custom_call.1} parent=0
    _
  %s11 = ssub.s32 1, %s9
  %s12 = scalar_select 0, %s11, %s9
  $region1: #{tpu_custom_call.1} parent=0
    #allocation2 [shape = 'u8[512]{0}', space=smem, size = 0x200, scoped, tag = 'input window, operand 0, single buffered']
    #allocation3 [shape = 's32[2]{0}', space=sflag, size = 0x8, scoped, tag = 'scoped memory for tpu_custom_call.1']
    #allocation4 [shape = 's32[2]{0}', space=sflag, size = 0x8, scoped, tag = 'scoped memory for tpu_custom_call.1']
    #allocation5 [shape = 'u8[512]{0}', space=smem, size = 0x200, scoped, tag = 'input window, operand 1, single buffered']
    #allocation6 [shape = 's32[1]{0}', space=sflag, size = 0x4, scoped, tag = 'scoped memory for tpu_custom_call.1']
    #allocation7 [shape = 'u8[512]{0}', space=smem, size = 0x200, scoped, tag = 'input window, operand 2, single buffered']
    #allocation8 [shape = 'u8[512]{0}', space=smem, size = 0x200, scoped, tag = 'input window, operand 3, single buffered']
    #allocation9 [shape = 's32[1]{0}', space=sflag, size = 0x4, scoped, tag = 'scoped memory for tpu_custom_call.1']
    #allocation10 [shape = 'u8[512]{0}', space=smem, size = 0x200, scoped, tag = 'input window, operand 4, single buffered']
    #allocation11 [shape = 'u8[512]{0}', space=smem, size = 0x200, scoped, tag = 'input window, operand 5, single buffered']
    #allocation12 [shape = 's32[1]{0}', space=sflag, size = 0x4, scoped, tag = 'scoped memory for tpu_custom_call.1']
    #allocation13 [shape = 'u8[512]{0}', space=smem, size = 0x200, scoped, tag = 'input window, operand 6, single buffered']
    #allocation14 [shape = 'u8[6144]{0}', space=vmem, size = 0x1800, scoped, tag = 'output window, operand 0']
    %13 = vsyncpa [#allocation4], 0
    %14 = vsyncpa [#allocation6], 0
    %15 = vsyncpa [#allocation9], 0
    %16 = vsyncpa [#allocation12], 0
    %17 = vsyncpa [#allocation3], 0
    %s18 = scalar_lea.sflag [#allocation3], 1
    %19 = vsyncpa %s18, 0
    loop: start=0, step=1, limit=4
    $region2: #{tpu_custom_call.1} parent=1 // loop_pre_header
      _
    $region3: #{tpu_custom_call.1} parent=1 // loop_header
      %s21 = sphi 0, %s25
      %p22 = scmp.ge.s32.totalorder %s21, 4
      %s28 = sphi 0, %s40
      %s29 = sphi 0, %s36
      %s30 = sphi 0, %s28
      %s31 = sphi 0, %s29
      %s32 = sphi 0, %s30
      %s33 = sphi 0, %s31
      %s41 = sphi 0, %s41
      %s43 = sphi 0, %s41
      %s44 = sphi 0, %s43
      %s58 = sphi 0, %s44
      %s62 = sphi 0, %s62
      %s64 = sphi 0, %s62
      %s65 = sphi 0, %s64
      %s79 = sphi 0, %s65
      %s83 = sphi 0, %s83
      %s85 = sphi 0, %s83
      %s86 = sphi 0, %s85
      %s100 = sphi 0, %s86
      %s104 = sphi 0, %s104
      %s106 = sphi 0, %s104
      %s107 = sphi 0, %s106
      %s121 = sphi 0, %s107
      %s125 = sphi 0, %s125
      %s127 = sphi 0, %s125
      %s128 = sphi 0, %s127
      %s142 = sphi 0, %s128
      %s146 = sphi 0, %s146
      %s148 = sphi 0, %s146
      %s149 = sphi 0, %s148
      %s163 = sphi 0, %s149
      %s167 = sphi 0, %s167
      %s169 = sphi 0, %s167
      %s170 = sphi 0, %s169
      %s184 = sphi 0, %s170
      %s192 = sphi 0, %s194
      %s195 = sphi 0, %s192
      %s196 = sphi 0, %s195
      %s212 = sphi 0, %s196
      %s220 = sphi 0, %s222
      %s223 = sphi 0, %s220
      %s224 = sphi 0, %s223
      %s240 = sphi 0, %s224
    $region4: #{tpu_custom_call.1} parent=1 // loop_header_branch
      %24 = sbr.rel (%p22) target = $region8
    $region5: #{tpu_custom_call.1} parent=1 // loop_body
      %s26 = ssub.s32 %s21, 1
      %s27 = ssub.s32 %s21, 2
      %s34 = sadd.s32 1, %s29
      %p35 = scmp.ge.s32.totalorder %s34, 1
      %s36 = scalar_select %p35, 0, %s34
      %s37 = sadd.s32 1, %s28
      %s38 = scalar_select %p35, %s37, %s28
      %p39 = scmp.ge.s32.totalorder %s38, 2
      %s40 = scalar_select %p39, 0, %s38
      %s42 = sadd.s32 %s41, 1
      %p45 = scmp.eq.s32.totalorder %s21, 1
      %p46 = scmp.ne.s32.totalorder %s41, %s43
      %p47 = scmp.eq.s32.totalorder %s21, 0
      %p48 = por %p46, %p47
      %p49 = scmp.ne.s32.totalorder %s41, %s43
      %p50 = scmp.eq.s32.totalorder %s26, 1
      %p51 = por %p49, %p50
      %p52 = scmp.ne.s32.totalorder %s43, %s44
      %p53 = scmp.eq.s32.totalorder %s26, 0
      %p54 = por %p52, %p53
      %p55 = scmp.ne.s32.totalorder %s43, %s44
      %p56 = scmp.eq.s32.totalorder %s27, 1
      %p57 = por %p55, %p56
      %p59 = scmp.ne.s32.totalorder %s44, %s58
      %p60 = scmp.eq.s32.totalorder %s27, 0
      %p61 = por %p59, %p60
      %s63 = sadd.s32 %s62, 1
      %p66 = scmp.eq.s32.totalorder %s21, 1
      %p67 = scmp.ne.s32.totalorder %s62, %s64
      %p68 = scmp.eq.s32.totalorder %s21, 0
      %p69 = por %p67, %p68
      %p70 = scmp.ne.s32.totalorder %s62, %s64
      %p71 = scmp.eq.s32.totalorder %s26, 1
      %p72 = por %p70, %p71
      %p73 = scmp.ne.s32.totalorder %s64, %s65
      %p74 = scmp.eq.s32.totalorder %s26, 0
      %p75 = por %p73, %p74
      %p76 = scmp.ne.s32.totalorder %s64, %s65
      %p77 = scmp.eq.s32.totalorder %s27, 1
      %p78 = por %p76, %p77
      %p80 = scmp.ne.s32.totalorder %s65, %s79
      %p81 = scmp.eq.s32.totalorder %s27, 0
      %p82 = por %p80, %p81
      %s84 = sadd.s32 %s83, 1
      %p87 = scmp.eq.s32.totalorder %s21, 1
      %p88 = scmp.ne.s32.totalorder %s83, %s85
      %p89 = scmp.eq.s32.totalorder %s21, 0
      %p90 = por %p88, %p89
      %p91 = scmp.ne.s32.totalorder %s83, %s85
      %p92 = scmp.eq.s32.totalorder %s26, 1
      %p93 = por %p91, %p92
      %p94 = scmp.ne.s32.totalorder %s85, %s86
      %p95 = scmp.eq.s32.totalorder %s26, 0
      %p96 = por %p94, %p95
      %p97 = scmp.ne.s32.totalorder %s85, %s86
      %p98 = scmp.eq.s32.totalorder %s27, 1
      %p99 = por %p97, %p98
      %p101 = scmp.ne.s32.totalorder %s86, %s100
      %p102 = scmp.eq.s32.totalorder %s27, 0
      %p103 = por %p101, %p102
      %s105 = sadd.s32 %s104, 1
      %p108 = scmp.eq.s32.totalorder %s21, 1
      %p109 = scmp.ne.s32.totalorder %s104, %s106
      %p110 = scmp.eq.s32.totalorder %s21, 0
      %p111 = por %p109, %p110
      %p112 = scmp.ne.s32.totalorder %s104, %s106
      %p113 = scmp.eq.s32.totalorder %s26, 1
      %p114 = por %p112, %p113
      %p115 = scmp.ne.s32.totalorder %s106, %s107
      %p116 = scmp.eq.s32.totalorder %s26, 0
      %p117 = por %p115, %p116
      %p118 = scmp.ne.s32.totalorder %s106, %s107
      %p119 = scmp.eq.s32.totalorder %s27, 1
      %p120 = por %p118, %p119
      %p122 = scmp.ne.s32.totalorder %s107, %s121
      %p123 = scmp.eq.s32.totalorder %s27, 0
      %p124 = por %p122, %p123
      %s126 = sadd.s32 %s125, 1
      %p129 = scmp.eq.s32.totalorder %s21, 1
      %p130 = scmp.ne.s32.totalorder %s125, %s127
      %p131 = scmp.eq.s32.totalorder %s21, 0
      %p132 = por %p130, %p131
      %p133 = scmp.ne.s32.totalorder %s125, %s127
      %p134 = scmp.eq.s32.totalorder %s26, 1
      %p135 = por %p133, %p134
      %p136 = scmp.ne.s32.totalorder %s127, %s128
      %p137 = scmp.eq.s32.totalorder %s26, 0
      %p138 = por %p136, %p137
      %p139 = scmp.ne.s32.totalorder %s127, %s128
      %p140 = scmp.eq.s32.totalorder %s27, 1
      %p141 = por %p139, %p140
      %p143 = scmp.ne.s32.totalorder %s128, %s142
      %p144 = scmp.eq.s32.totalorder %s27, 0
      %p145 = por %p143, %p144
      %s147 = sadd.s32 %s146, 1
      %p150 = scmp.eq.s32.totalorder %s21, 1
      %p151 = scmp.ne.s32.totalorder %s146, %s148
      %p152 = scmp.eq.s32.totalorder %s21, 0
      %p153 = por %p151, %p152
      %p154 = scmp.ne.s32.totalorder %s146, %s148
      %p155 = scmp.eq.s32.totalorder %s26, 1
      %p156 = por %p154, %p155
      %p157 = scmp.ne.s32.totalorder %s148, %s149
      %p158 = scmp.eq.s32.totalorder %s26, 0
      %p159 = por %p157, %p158
      %p160 = scmp.ne.s32.totalorder %s148, %s149
      %p161 = scmp.eq.s32.totalorder %s27, 1
      %p162 = por %p160, %p161
      %p164 = scmp.ne.s32.totalorder %s149, %s163
      %p165 = scmp.eq.s32.totalorder %s27, 0
      %p166 = por %p164, %p165
      %s168 = sadd.s32 %s167, 1
      %p171 = scmp.eq.s32.totalorder %s21, 1
      %p172 = scmp.ne.s32.totalorder %s167, %s169
      %p173 = scmp.eq.s32.totalorder %s21, 0
      %p174 = por %p172, %p173
      %p175 = scmp.ne.s32.totalorder %s167, %s169
      %p176 = scmp.eq.s32.totalorder %s26, 1
      %p177 = por %p175, %p176
      %p178 = scmp.ne.s32.totalorder %s169, %s170
      %p179 = scmp.eq.s32.totalorder %s26, 0
      %p180 = por %p178, %p179
      %p181 = scmp.ne.s32.totalorder %s169, %s170
      %p182 = scmp.eq.s32.totalorder %s27, 1
      %p183 = por %p181, %p182
      %p185 = scmp.ne.s32.totalorder %s170, %s184
      %p186 = scmp.eq.s32.totalorder %s27, 0
      %p187 = por %p185, %p186
      %s188 = ssub.s32 %s28, %s40
      %s189 = ssub.s32 %s29, %s36
      %s190 = sor.u32 %s188, %s189
      %p191 = scmp.eq.s32.totalorder %s190, 0
      %s193 = sadd.s32 %s192, 1
      %s194 = scalar_select %p191, %s192, %s193
      %p197 = pneg %p191
      %p198 = scmp.eq.s32.totalorder %s21, 1
      %p199 = por %p197, %p198
      %p200 = scmp.ne.s32.totalorder %s192, %s195
      %p201 = scmp.eq.s32.totalorder %s21, 0
      %p202 = por %p200, %p201
      %p203 = scmp.ne.s32.totalorder %s192, %s195
      %p204 = scmp.eq.s32.totalorder %s26, 1
      %p205 = por %p203, %p204
      %p206 = scmp.ne.s32.totalorder %s195, %s196
      %p207 = scmp.eq.s32.totalorder %s26, 0
      %p208 = por %p206, %p207
      %p209 = scmp.ne.s32.totalorder %s195, %s196
      %p210 = scmp.eq.s32.totalorder %s27, 1
      %p211 = por %p209, %p210
      %p213 = scmp.ne.s32.totalorder %s196, %s212
      %p214 = scmp.eq.s32.totalorder %s27, 0
      %p215 = por %p213, %p214
      %s216 = ssub.s32 %s28, %s40
      %s217 = ssub.s32 %s29, %s36
      %s218 = sor.u32 %s216, %s217
      %p219 = scmp.eq.s32.totalorder %s218, 0
      %s221 = sadd.s32 %s220, 1
      %s222 = scalar_select %p219, %s220, %s221
      %p225 = pneg %p219
      %p226 = scmp.eq.s32.totalorder %s21, 1
      %p227 = por %p225, %p226
      %p228 = scmp.ne.s32.totalorder %s220, %s223
      %p229 = scmp.eq.s32.totalorder %s21, 0
      %p230 = por %p228, %p229
      %p231 = scmp.ne.s32.totalorder %s220, %s223
      %p232 = scmp.eq.s32.totalorder %s26, 1
      %p233 = por %p231, %p232
      %p234 = scmp.ne.s32.totalorder %s223, %s224
      %p235 = scmp.eq.s32.totalorder %s26, 0
      %p236 = por %p234, %p235
      %p237 = scmp.ne.s32.totalorder %s223, %s224
      %p238 = scmp.eq.s32.totalorder %s27, 1
      %p239 = por %p237, %p238
      %p241 = scmp.ne.s32.totalorder %s224, %s240
      %p242 = scmp.eq.s32.totalorder %s27, 0
      %p243 = por %p241, %p242
      %p244 = scmp.le.s32.totalorder 1, %s21
      %p245 = scmp.lt.s32.totalorder %s21, 3
      %p246 = pnand %p244, %p245
      %p247 = pneg %p246
      // Predicated region
      $region9: #{tpu_custom_call.1} parent=5 // pred_check
        _
      $region10: #{tpu_custom_call.1} parent=5 // pred_check_branch
        %249 = sbr.rel (%p246) target = $region12
      $region11: #{tpu_custom_call.1} parent=5 // pred_region
        %s250 = ssub.s32 %s21, 1
        // Predicated region
        $region13: #{tpu_custom_call.1} parent=11 // pred_check
          %p251 = pneg %p54
        $region14: #{tpu_custom_call.1} parent=11 // pred_check_branch
          %253 = sbr.rel (%p251) target = $region16
        $region15: #{tpu_custom_call.1} parent=11 // pred_region
          %s255 = ssub.s32 16, 16
          %256 = vsyncadd [#allocation4], %s255
          %259 = dma.hbm_to_smem %s0, 16, [#allocation2], [#allocation4]
        $region16: #{tpu_custom_call.1} parent=11 // pred_fallthru
          _
        // Predicated region
        $region17: #{tpu_custom_call.1} parent=11 // pred_check
          %p260 = pneg %p75
        $region18: #{tpu_custom_call.1} parent=11 // pred_check_branch
          %262 = sbr.rel (%p260) target = $region20
        $region19: #{tpu_custom_call.1} parent=11 // pred_region
          %s264 = ssub.s32 16, 16
          %265 = vsyncadd [#allocation6], %s264
          %268 = dma.hbm_to_smem %s1, 16, [#allocation5], [#allocation6]
        $region20: #{tpu_custom_call.1} parent=11 // pred_fallthru
          _
        // Predicated region
        $region21: #{tpu_custom_call.1} parent=11 // pred_check
          %p269 = pneg %p96
        $region22: #{tpu_custom_call.1} parent=11 // pred_check_branch
          %271 = sbr.rel (%p269) target = $region24
        $region23: #{tpu_custom_call.1} parent=11 // pred_region
          %s273 = ssub.s32 16, 16
          %274 = vsyncadd [#allocation6], %s273
          %277 = dma.hbm_to_smem %s2, 16, [#allocation7], [#allocation6]
        $region24: #{tpu_custom_call.1} parent=11 // pred_fallthru
          _
        // Predicated region
        $region25: #{tpu_custom_call.1} parent=11 // pred_check
          %p278 = pneg %p117
        $region26: #{tpu_custom_call.1} parent=11 // pred_check_branch
          %280 = sbr.rel (%p278) target = $region28
        $region27: #{tpu_custom_call.1} parent=11 // pred_region
          %s282 = ssub.s32 16, 16
          %283 = vsyncadd [#allocation9], %s282
          %286 = dma.hbm_to_smem %s3, 16, [#allocation8], [#allocation9]
        $region28: #{tpu_custom_call.1} parent=11 // pred_fallthru
          _
        // Predicated region
        $region29: #{tpu_custom_call.1} parent=11 // pred_check
          %p287 = pneg %p138
        $region30: #{tpu_custom_call.1} parent=11 // pred_check_branch
          %289 = sbr.rel (%p287) target = $region32
        $region31: #{tpu_custom_call.1} parent=11 // pred_region
          %s291 = ssub.s32 16, 16
          %292 = vsyncadd [#allocation9], %s291
          %295 = dma.hbm_to_smem %s4, 16, [#allocation10], [#allocation9]
        $region32: #{tpu_custom_call.1} parent=11 // pred_fallthru
          _
        // Predicated region
        $region33: #{tpu_custom_call.1} parent=11 // pred_check
          %p296 = pneg %p159
        $region34: #{tpu_custom_call.1} parent=11 // pred_check_branch
          %298 = sbr.rel (%p296) target = $region36
        $region35: #{tpu_custom_call.1} parent=11 // pred_region
          %s300 = ssub.s32 16, 16
          %301 = vsyncadd [#allocation12], %s300
          %304 = dma.hbm_to_smem %s5, 16, [#allocation11], [#allocation12]
        $region36: #{tpu_custom_call.1} parent=11 // pred_fallthru
          _
        // Predicated region
        $region37: #{tpu_custom_call.1} parent=11 // pred_check
          %p305 = pneg %p180
        $region38: #{tpu_custom_call.1} parent=11 // pred_check_branch
          %307 = sbr.rel (%p305) target = $region40
        $region39: #{tpu_custom_call.1} parent=11 // pred_region
          %s309 = ssub.s32 16, 16
          %310 = vsyncadd [#allocation12], %s309
          %313 = dma.hbm_to_smem %s6, 16, [#allocation13], [#allocation12]
        $region40: #{tpu_custom_call.1} parent=11 // pred_fallthru
          _
      $region12: #{tpu_custom_call.1} parent=5 // pred_fallthru
        _
      %p314 = scmp.lt.s32.totalorder %s21, 2
      // Predicated region
      $region41: #{tpu_custom_call.1} parent=5 // pred_check
        %p315 = pneg %p314
      $region42: #{tpu_custom_call.1} parent=5 // pred_check_branch
        %317 = sbr.rel (%p315) target = $region44
      $region43: #{tpu_custom_call.1} parent=5 // pred_region
        // Predicated region
        $region45: #{tpu_custom_call.1} parent=43 // pred_check
          %p318 = pneg %p202
        $region46: #{tpu_custom_call.1} parent=43 // pred_check_branch
          %320 = sbr.rel (%p318) target = $region48
        $region47: #{tpu_custom_call.1} parent=43 // pred_region
          %p321 = scmp.lt.s32.totalorder %s28, 1
          %s322 = scalar_select %p321, %s28, 1
          %p323 = scmp.lt.s32.totalorder %s29, 0
          %s324 = scalar_select %p323, %s29, 0
          %s325 = smul.addr %s322, 3
          %s326 = sadd.s32 %s324, %s325
          %s327 = smul.addr %s326, 2
          %s328 = scalar_lea.vmem %s7, %s327
        $region48: #{tpu_custom_call.1} parent=43 // pred_fallthru
          _
      $region44: #{tpu_custom_call.1} parent=5 // pred_fallthru
        _
      %p329 = scmp.le.s32.totalorder 1, %s21
      %p330 = scmp.lt.s32.totalorder %s21, 3
      %p331 = pnand %p329, %p330
      %p332 = pneg %p331
      // Predicated region
      $region49: #{tpu_custom_call.1} parent=5 // pred_check
        _
      $region50: #{tpu_custom_call.1} parent=5 // pred_check_branch
        %334 = sbr.rel (%p331) target = $region52
      $region51: #{tpu_custom_call.1} parent=5 // pred_region
        %s335 = ssub.s32 %s21, 1
        // Predicated region
        $region53: #{tpu_custom_call.1} parent=51 // pred_check
          %p336 = pneg %p54
        $region54: #{tpu_custom_call.1} parent=51 // pred_check_branch
          %338 = sbr.rel (%p336) target = $region56
        $region55: #{tpu_custom_call.1} parent=51 // pred_region
          %339 = dma.done [#allocation4], 16
        $region56: #{tpu_custom_call.1} parent=51 // pred_fallthru
          _
        // Predicated region
        $region57: #{tpu_custom_call.1} parent=51 // pred_check
          %p340 = pneg %p75
        $region58: #{tpu_custom_call.1} parent=51 // pred_check_branch
          %342 = sbr.rel (%p340) target = $region60
        $region59: #{tpu_custom_call.1} parent=51 // pred_region
          %343 = dma.done [#allocation6], 16
        $region60: #{tpu_custom_call.1} parent=51 // pred_fallthru
          _
        // Predicated region
        $region61: #{tpu_custom_call.1} parent=51 // pred_check
          %p344 = pneg %p96
        $region62: #{tpu_custom_call.1} parent=51 // pred_check_branch
          %346 = sbr.rel (%p344) target = $region64
        $region63: #{tpu_custom_call.1} parent=51 // pred_region
          %347 = dma.done [#allocation6], 16
        $region64: #{tpu_custom_call.1} parent=51 // pred_fallthru
          _
        // Predicated region
        $region65: #{tpu_custom_call.1} parent=51 // pred_check
          %p348 = pneg %p117
        $region66: #{tpu_custom_call.1} parent=51 // pred_check_branch
          %350 = sbr.rel (%p348) target = $region68
        $region67: #{tpu_custom_call.1} parent=51 // pred_region
          %351 = dma.done [#allocation9], 16
        $region68: #{tpu_custom_call.1} parent=51 // pred_fallthru
          _
        // Predicated region
        $region69: #{tpu_custom_call.1} parent=51 // pred_check
          %p352 = pneg %p138
        $region70: #{tpu_custom_call.1} parent=51 // pred_check_branch
          %354 = sbr.rel (%p352) target = $region72
        $region71: #{tpu_custom_call.1} parent=51 // pred_region
          %355 = dma.done [#allocation9], 16
        $region72: #{tpu_custom_call.1} parent=51 // pred_fallthru
          _
        // Predicated region
        $region73: #{tpu_custom_call.1} parent=51 // pred_check
          %p356 = pneg %p159
        $region74: #{tpu_custom_call.1} parent=51 // pred_check_branch
          %358 = sbr.rel (%p356) target = $region76
        $region75: #{tpu_custom_call.1} parent=51 // pred_region
          %359 = dma.done [#allocation12], 16
        $region76: #{tpu_custom_call.1} parent=51 // pred_fallthru
          _
        // Predicated region
        $region77: #{tpu_custom_call.1} parent=51 // pred_check
          %p360 = pneg %p180
        $region78: #{tpu_custom_call.1} parent=51 // pred_check_branch
          %362 = sbr.rel (%p360) target = $region80
        $region79: #{tpu_custom_call.1} parent=51 // pred_region
          %363 = dma.done [#allocation12], 16
        $region80: #{tpu_custom_call.1} parent=51 // pred_fallthru
          _
        %364 = sfence
        %p365 = pneg %p54
        %p366 = pneg %p51
        %p367 = pneg %p75
        %p368 = pneg %p72
        %p369 = pneg %p96
        %p370 = pneg %p93
        %p371 = pneg %p117
        %p372 = pneg %p114
        %p373 = pneg %p138
        %p374 = pneg %p135
        %p375 = pneg %p159
        %p376 = pneg %p156
        %p377 = pneg %p180
        %p378 = pneg %p177
        %p379 = scmp.lt.s32.totalorder %s30, 1
        %s380 = scalar_select %p379, %s30, 1
        %p381 = scmp.lt.s32.totalorder %s31, 0
        %s382 = scalar_select %p381, %s31, 0
        %s383 = smul.addr %s380, 3
        %s384 = sadd.s32 %s382, %s383
        %s385 = smul.addr %s384, 2
        %s386 = scalar_lea.vmem %s7, %s385
        %p387 = pneg %p208
        %p388 = pneg %p205
        %p389 = pneg %p236
        %p390 = pneg %p233
        %s391 = sand.u32 %s223, 1
        %s392 = scalar_lea.sflag [#allocation3], %s391
        %s393 = sand.u32 %s223, 1
        %s394 = smul.addr %s393, 6
        %s395 = scalar_lea.vmem [#allocation14], %s394
        %p396 = scmp.lt.s32.totalorder %s30, 1
        %s397 = scalar_select %p396, %s30, 1
        %p398 = scmp.lt.s32.totalorder %s31, 0
        %s399 = scalar_select %p398, %s31, 0
        %s400 = smul.addr %s397, 3
        %s401 = sadd.s32 %s399, %s400
        %s402 = smul.addr %s401, 2
        %s403 = scalar_lea.vmem %s7, %s402
        %s404 = sld [smem:[#allocation2]]
        %s405 = sld [smem:[#allocation2 + $0x1]]
        %s406 = sld [smem:[#allocation2 + $0x2]]
        %s407 = sld [smem:[#allocation2 + $0x3]]
        %s408 = sld [smem:[#allocation2 + $0x4]]
        %s409 = sld [smem:[#allocation2 + $0x5]]
        %s410 = sld [smem:[#allocation2 + $0x6]]
        %s411 = sld [smem:[#allocation2 + $0x7]]
        %s412 = sld [smem:[#allocation2 + $0x8]]
        %s413 = sld [smem:[#allocation5]]
        %s414 = sld [smem:[#allocation5 + $0x1]]
        %s415 = sld [smem:[#allocation5 + $0x2]]
        %s416 = sld [smem:[#allocation5 + $0x3]]
        %s417 = sld [smem:[#allocation7]]
        %s418 = sld [smem:[#allocation7 + $0x1]]
        %s419 = sld [smem:[#allocation8]]
        %s420 = sld [smem:[#allocation8 + $0x1]]
        %s421 = sld [smem:[#allocation8 + $0x2]]
        %s422 = sld [smem:[#allocation8 + $0x3]]
        %s423 = sld [smem:[#allocation10]]
        %s424 = sld [smem:[#allocation10 + $0x1]]
        %s425 = sld [smem:[#allocation10 + $0x2]]
        %s426 = sld [smem:[#allocation10 + $0x3]]
        %s427 = sld [smem:[#allocation11]]
        %s428 = sld [smem:[#allocation11 + $0x1]]
        %s429 = sld [smem:[#allocation11 + $0x2]]
        %s430 = sld [smem:[#allocation11 + $0x3]]
        %s431 = sld [smem:[#allocation13]]
        %s432 = sld [smem:[#allocation13 + $0x1]]
        %s433 = sld [smem:[#allocation13 + $0x2]]
        %s434 = sld [smem:[#allocation13 + $0x3]]
        %v435 = vld [vmem:[%s403] sm:$0x3]
        %s436 = scalar_lea.vmem %s403, 2
        %v437 = vld [vmem:[%s436] sm:$0x3]
        %s438 = scalar_lea.vmem %s403, 4
        %v439 = vld [vmem:[%s438] sm:$0x3]
        %v440 = vstv %s404
        %v441 = vmul.f32 %v440, %v435
        %v442 = vstv %s405
        %v443 = vmul.f32 %v442, %v437
        %v444 = vadd.f32 %v441, %v443
        %v445 = vstv %s406
        %v446 = vmul.f32 %v445, %v439
        %v447 = vadd.f32 %v444, %v446
        %v448 = vstv %s407
        %v449 = vmul.f32 %v448, %v435
        %v450 = vstv %s408
        %v451 = vmul.f32 %v450, %v437
        %v452 = vadd.f32 %v449, %v451
        %v453 = vstv %s409
        %v454 = vmul.f32 %v453, %v439
        %v455 = vadd.f32 %v452, %v454
        %v456 = vstv %s410
        %v457 = vmul.f32 %v456, %v435
        %v458 = vstv %s411
        %v459 = vmul.f32 %v458, %v437
        %v460 = vadd.f32 %v457, %v459
        %v461 = vstv %s412
        %v462 = vmul.f32 %v461, %v439
        %v463 = vadd.f32 %v460, %v462
        %v464 = vstv %s413
        %v465 = vmul.f32 %v464, %v455
        %v466 = vadd.f32 %v447, %v465
        %v467 = vstv %s414
        %v468 = vmul.f32 %v467, %v463
        %v469 = vadd.f32 %v466, %v468
        %v470 = vstv %s417
        %v471 = vadd.f32 %v469, %v470
        %v472 = vstv %s427
        %v473 = vmul.f32 %v472, %v471
        %v474 = vstv %s431
        %v475 = vadd.f32 %v473, %v474
        %v476 = vtanh.pop %v475
        %v477 = vstv %s428
        %v478 = vmul.f32 %v477, %v471
        %v479 = vstv %s432
        %v480 = vadd.f32 %v478, %v479
        %v481 = vtanh.pop %v480
        %v482 = vmul.f32 %v476, 1.442695
        %v483 = vpow.pop %v482
        %v484 = vmul.f32 %v455, %v483
        %v485 = vstv %s419
        %v486 = vmul.f32 %v485, %v471
        %v487 = vadd.f32 %v484, %v486
        %v488 = vstv %s423
        %v489 = vadd.f32 %v487, %v488
        %v490 = vmul.f32 %v481, 1.442695
        %v491 = vpow.pop %v490
        %v492 = vmul.f32 %v463, %v491
        %v493 = vstv %s420
        %v494 = vmul.f32 %v493, %v471
        %v495 = vadd.f32 %v492, %v494
        %v496 = vstv %s424
        %v497 = vadd.f32 %v495, %v496
        %v498 = vstv %s415
        %v499 = vmul.f32 %v498, %v489
        %v500 = vadd.f32 %v471, %v499
        %v501 = vstv %s416
        %v502 = vmul.f32 %v501, %v497
        %v503 = vadd.f32 %v500, %v502
        %v504 = vstv %s418
        %v505 = vadd.f32 %v503, %v504
        %v506 = vstv %s429
        %v507 = vmul.f32 %v506, %v505
        %v508 = vstv %s433
        %v509 = vadd.f32 %v507, %v508
        %v510 = vtanh.pop %v509
        %v511 = vstv %s430
        %v512 = vmul.f32 %v511, %v505
        %v513 = vstv %s434
        %v514 = vadd.f32 %v512, %v513
        %v515 = vtanh.pop %v514
        %v516 = vmul.f32 %v510, 1.442695
        %v517 = vpow.pop %v516
        %v518 = vmul.f32 %v489, %v517
        %v519 = vstv %s421
        %v520 = vmul.f32 %v519, %v505
        %v521 = vadd.f32 %v518, %v520
        %v522 = vstv %s425
        %v523 = vadd.f32 %v521, %v522
        %v524 = vmul.f32 %v515, 1.442695
        %v525 = vpow.pop %v524
        %v526 = vmul.f32 %v497, %v525
        %v527 = vstv %s422
        %v528 = vmul.f32 %v527, %v505
        %v529 = vadd.f32 %v526, %v528
        %v530 = vstv %s426
        %v531 = vadd.f32 %v529, %v530
        %532 = vst [vmem:[%s395] sm:$0x3] %v505
        %s533 = scalar_lea.vmem %s395, 2 [#allocation14]
        %534 = vst [vmem:[%s533] sm:$0x3] %v523
        %s535 = scalar_lea.vmem %s395, 4 [#allocation14]
        %536 = vst [vmem:[%s535] sm:$0x3] %v531
        %s537 = sand.u32 %s223, 1
        %s538 = scalar_lea.sflag [#allocation3], %s537
        %s539 = sand.u32 %s223, 1
        %s540 = smul.addr %s539, 6
        %s541 = scalar_lea.vmem [#allocation14], %s540
        // Predicated region
        $region81: #{tpu_custom_call.1} parent=51 // pred_check
          %p542 = pneg %p233
        $region82: #{tpu_custom_call.1} parent=51 // pred_check_branch
          %544 = sbr.rel (%p542) target = $region84
        $region83: #{tpu_custom_call.1} parent=51 // pred_region
          %s546 = ssub.s32 96, 96
          %547 = vsyncadd %s538, %s546
          %s548 = smul.addr %s30, 3
          %s549 = sadd.s32 %s31, %s548
          %s550 = smul.addr %s549, 32
          %s551 = scalar_lea.hbm %s8, %s550
          %s552 = sshll.u32 %s541, 4
          %s553 = int_to_ptr.vmem [resolvable:$true] %s552
          %558 = dma.vmem_to_hbm [thread:$0]  %s553, 96, %s551, %s538, 32, 32, 2
        $region84: #{tpu_custom_call.1} parent=51 // pred_fallthru
          _
      $region52: #{tpu_custom_call.1} parent=5 // pred_fallthru
        _
      %p559 = scmp.le.s32.totalorder 2, %s21
      // Predicated region
      $region85: #{tpu_custom_call.1} parent=5 // pred_check
        %p560 = pneg %p559
      $region86: #{tpu_custom_call.1} parent=5 // pred_check_branch
        %562 = sbr.rel (%p560) target = $region88
      $region87: #{tpu_custom_call.1} parent=5 // pred_region
        %s563 = ssub.s32 %s21, 2
        // Predicated region
        $region89: #{tpu_custom_call.1} parent=87 // pred_check
          %p564 = pneg %p239
        $region90: #{tpu_custom_call.1} parent=87 // pred_check_branch
          %566 = sbr.rel (%p564) target = $region92
        $region91: #{tpu_custom_call.1} parent=87 // pred_region
          %s567 = sand.u32 %s224, 1
          %s568 = scalar_lea.sflag [#allocation3], %s567
          %s569 = sand.u32 %s224, 1
          %s570 = smul.addr %s569, 6
          %s571 = scalar_lea.vmem [#allocation14], %s570
          %572 = dma.done %s568, 96
        $region92: #{tpu_custom_call.1} parent=87 // pred_fallthru
          _
      $region88: #{tpu_custom_call.1} parent=5 // pred_fallthru
        _
    $region6: #{tpu_custom_call.1} parent=1 // loop_footer
      %s25 = sadd.s32 1, %s21
    $region7: #{tpu_custom_call.1} parent=1 // loop_footer_branch
      %20 = sbr.rel target = $region3
    $region8: #{tpu_custom_call.1} parent=1 // loop_exit
      _
    %573 = vsyncpa [#allocation3], 1
    %s574 = scalar_lea.sflag [#allocation3], 1
    %575 = vsyncpa %s574, 1
    %576 = vsyncpa [#allocation4], 1
    %s577 = scalar_lea.sflag [#allocation4], 1
    %578 = vsyncpa %s577, 1
    %579 = vsyncpa [#allocation6], 1
    %580 = vsyncpa [#allocation9], 1
    %581 = vsyncpa [#allocation12], 1

</llo_original>
